<compile_context>
chip_gen: v6e
topology: v6e:2x2x1
jax: 0.10.0
libtpu: 0.0.40
codegen_flags: <defaults>
</compile_context>

<pallas_src>
import functools

import jax
import jax.numpy as jnp
from jax.experimental import pallas as pl
from jax.experimental.pallas import tpu as pltpu


# ----------------------------------------------------------------------------
# Pallas kernel: fused matmul + bias + optional tanh
# ----------------------------------------------------------------------------
def _matmul_bias_act_kernel(x_ref, w_ref, b_ref, o_ref, *, activation):
    y = jnp.dot(x_ref[...], w_ref[...], preferred_element_type=jnp.float32)
    y = y + b_ref[...]
    if activation == "tanh":
        y = jnp.tanh(y)
    o_ref[...] = y.astype(o_ref.dtype)


def fused_linear(x, w, b, *, activation=None, block_n=None, bias_per_row=False):
    """act(x @ w + b).  x: (M, K), w: (K, N).

    b: (N,) column bias (broadcast over rows) or, with bias_per_row=True, (M,) row bias.
    The N (lane) axis can be tiled with `block_n` so a large second operand streams through
    VMEM while the small first operand stays resident; all blocks are lane-dense.
    """
    M, K = x.shape
    Kw, N = w.shape
    assert K == Kw
    if block_n is None or block_n >= N or N % block_n != 0:
        block_n = N
    grid = (N // block_n,)

    if bias_per_row:
        b_arr = b.reshape(M, 1)
        b_spec = pl.BlockSpec((M, 1), lambda j: (0, 0))
    else:
        b_arr = b.reshape(1, N)
        b_spec = pl.BlockSpec((1, block_n), lambda j: (0, j))

    kern = functools.partial(_matmul_bias_act_kernel, activation=activation)
    return pl.pallas_call(
        kern,
        out_shape=jax.ShapeDtypeStruct((M, N), x.dtype),
        grid=grid,
        in_specs=[
            pl.BlockSpec((M, K), lambda j: (0, 0)),        # small operand, resident
            pl.BlockSpec((K, block_n), lambda j: (0, j)),  # large operand, streamed over N
            b_spec,
        ],
        out_specs=pl.BlockSpec((M, block_n), lambda j: (0, j)),
        compiler_params=pltpu.CompilerParams(dimension_semantics=("arbitrary",)),
    )(x, w, b_arr)


# ----------------------------------------------------------------------------
# XLA-side layout plumbing (index shuffles only, no math)
# ----------------------------------------------------------------------------
def _im2col_k4_s2_p1(x):
    """x: (N, C, D1, D2, D3) -> (C*64, N*Do1*Do2*Do3) patches for conv k=4, s=2, p=1.

    Row order is (c_in, a, b, c), matching w.reshape(C_out, C_in*64).
    Column order is (n, i, j, k).
    """
    N, C, D1, D2, D3 = x.shape
    Do1, Do2, Do3 = D1 // 2, D2 // 2, D3 // 2
    xp = jnp.pad(x, ((0, 0), (0, 0), (1, 1), (1, 1), (1, 1)))
    cols = []
    for a in range(4):
        for b in range(4):
            for c in range(4):
                cols.append(jax.lax.slice(
                    xp, (0, 0, a, b, c),
                    (N, C, a + 2 * Do1 - 1, b + 2 * Do2 - 1, c + 2 * Do3 - 1),
                    (1, 1, 2, 2, 2)))                      # (N, C, Do1, Do2, Do3)
    pat = jnp.stack(cols, axis=2)                          # (N, C, 64, Do1, Do2, Do3)
    pat = pat.reshape(N, C * 64, Do1 * Do2 * Do3)
    return jnp.transpose(pat, (1, 0, 2)).reshape(C * 64, N * Do1 * Do2 * Do3)


# ----------------------------------------------------------------------------
# PatchDecodingCNN4D forward
# ----------------------------------------------------------------------------
def patch_decoding_cnn4d(x, params, *, out_channel, patch_size, embedding_dim):
    """x: (B, T, C*embedding_dim, n1, n2, n3) — the module's pre-permute input layout
    (forward() moves T to the last axis; since every layer uses kernel=1/stride=1/pad=0
    along that 4th spatial axis, it is folded into the batch here).

    Returns (B, out_channel, n1*patch_size, n2*patch_size, n3*patch_size, T).
    """
    B, T, Cin, n1, n2, n3 = x.shape
    C = out_channel
    Cmid = 2 * C
    K1 = patch_size // 2
    Ne = B * T

    # fold the trivial 4th spatial axis into batch; rows = (b, i, j, k), cols = c_in
    x1 = x.reshape(Ne, Cin, n1, n2, n3)
    x1f = jnp.transpose(x1, (0, 2, 3, 4, 1)).reshape(Ne * n1 * n2 * n3, Cin)

    # --- patch_dedec1 + tanh: ConvTranspose with kernel == stride == per-voxel linear,
    #     then pixel-shuffle the (co, a, b, c) output columns into the spatial grid.
    y1 = fused_linear(x1f, params["w1f"], params["b1f"], activation="tanh")
    s1 = (n1 * K1, n2 * K1, n3 * K1)
    y1 = y1.reshape(Ne, n1, n2, n3, Cmid, K1, K1, K1)
    x2f = jnp.transpose(y1, (0, 1, 5, 2, 6, 3, 7, 4)).reshape(
        Ne * s1[0] * s1[1] * s1[2], Cmid)

    # --- patch_dedec2 + tanh: ConvTranspose kernel == stride == 4, same trick.
    K2 = 4
    y2 = fused_linear(x2f, params["w2f"], params["b2f"], activation="tanh")
    s2 = (s1[0] * K2, s1[1] * K2, s1[2] * K2)
    y2 = y2.reshape(Ne, s1[0], s1[1], s1[2], Cmid, K2, K2, K2)
    act2 = jnp.transpose(y2, (0, 4, 1, 5, 2, 6, 3, 7)).reshape(Ne, Cmid, *s2)

    # --- patch_dedec3: Conv k=4, s=2, p=1 (no activation). im2col in XLA, then one
    #     lane-dense Pallas matmul (C, Cmid*64) @ (Cmid*64, Ne*prod(so)), tiled over the
    #     wide lane axis so the 16 MB patch matrix streams through VMEM.
    so = (s2[0] // 2, s2[1] // 2, s2[2] // 2)
    pat = _im2col_k4_s2_p1(act2)
    out_t = fused_linear(params["w3f"], pat, params["b3"],
                         activation=None, block_n=2048, bias_per_row=True)
    out = out_t.reshape(C, B, T, *so)
    return jnp.transpose(out, (1, 0, 3, 4, 5, 2))          # (B, C, so1, so2, so3, T)


# ----------------------------------------------------------------------------
# Parameters (PyTorch layouts) and one-time host-side packing
# ----------------------------------------------------------------------------
def init_params(key, out_channel, patch_size, embedding_dim):
    """ConvTranspose weights: (C_in, C_out, k, k, k); Conv weights: (C_out, C_in, k, k, k).
    The size-1 4th kernel axis of the 4-D convs is dropped (it is identity)."""
    C, E = out_channel, embedding_dim
    Cin1, Cmid, K1 = C * E, 2 * C, patch_size // 2
    ks = jax.random.split(key, 6)

    def nrm(k, shape, scale=0.05):
        return (scale * jax.random.normal(k, shape)).astype(jnp.float32)

    return dict(
        w1=nrm(ks[0], (Cin1, Cmid, K1, K1, K1)), b1=nrm(ks[1], (Cmid,)),
        w2=nrm(ks[2], (Cmid, Cmid, 4, 4, 4)),    b2=nrm(ks[3], (Cmid,)),
        w3=nrm(ks[4], (C, Cmid, 4, 4, 4)),       b3=nrm(ks[5], (C,)),
    )


def pack_params(p):
    """Pack weights once on the host into the matmul layouts the kernels consume,
    so the jitted forward performs no weight transposes/reshapes."""
    Cin1, Cmid, K1 = p["w1"].shape[0], p["w1"].shape[1], p["w1"].shape[2]
    C = p["w3"].shape[0]
    return dict(
        w1f=p["w1"].reshape(Cin1, Cmid * K1 ** 3),   # cols ordered (c_out, a, b, c)
        b1f=jnp.repeat(p["b1"], K1 ** 3),
        w2f=p["w2"].reshape(Cmid, Cmid * 64),
        b2f=jnp.repeat(p["b2"], 64),
        w3f=p["w3"].reshape(C, Cmid * 64),           # cols ordered (c_in, a, b, c)
        b3=p["b3"],
    )


if __name__ == "__main__":
    out_channel = 4       # C
    patch_size = 8        # dedec1 kernel/stride = patch_size // 2 = 4
    embedding_dim = 8     # dedec1 in_channels = C * embedding_dim = 32
    input_size = 16       # final spatial size = (input_size // patch_size) * patch_size
    B, T = 2, 1           # batch, 4th (kernel-1) spatial axis

    n = input_size // patch_size                 # patch grid = 2
    Cin = out_channel * embedding_dim

    key = jax.random.PRNGKey(0)
    kx, kp = jax.random.split(key)
    # Module input (pre-permute): (B, T, C*E, n, n, n); forward() permutes T to the end.
    x = jax.random.normal(kx, (B, T, Cin, n, n, n), jnp.float32)
    params = pack_params(init_params(kp, out_channel, patch_size, embedding_dim))

    # light self-check of the Pallas matmul kernel against a plain-JAX matmul
    xt = jax.random.normal(jax.random.PRNGKey(1), (16, 32), jnp.float32)
    wt = jax.random.normal(jax.random.PRNGKey(2), (32, 512), jnp.float32)
    bt = jax.random.normal(jax.random.PRNGKey(3), (512,), jnp.float32)
    got = fused_linear(xt, wt, bt)
    want = jax.lax.dot(xt, wt, precision=jax.lax.Precision.HIGHEST) + bt
    rel = float(jnp.max(jnp.abs(got - want)) / (jnp.max(jnp.abs(want)) + 1e-6))
    assert rel < 5e-2, rel

    fwd = jax.jit(functools.partial(
        patch_decoding_cnn4d, out_channel=out_channel,
        patch_size=patch_size, embedding_dim=embedding_dim))
    y = fwd(x, params)
    jax.block_until_ready(y)

    assert y.shape == (B, out_channel, input_size, input_size, input_size, T), y.shape
    assert y.dtype == jnp.float32
    assert bool(jnp.all(jnp.isfinite(y)))
    print("KERNEL_OK")
</pallas_src>

<mosaic_0001>
module attributes {stable_mosaic.version = 11 : i64} {
  func.func @_matmul_bias_act_kernel(%arg0: i32, %arg1: memref<16x32xf32, #tpu.memory_space<vmem>>, %arg2: memref<32x512xf32, #tpu.memory_space<vmem>>, %arg3: memref<1x512xf32, #tpu.memory_space<vmem>>, %arg4: memref<16x512xf32, #tpu.memory_space<vmem>>) attributes {dimension_semantics = [#tpu.dimension_semantics<arbitrary>], iteration_bounds = array<i64: 1>, scalar_prefetch = 0 : i64, scratch_operands = 0 : i64, tpu.core_type = #tpu.core_type<tc>, window_params = [{pipeline_mode = #tpu.pipeline_mode<synchronous>, transform_indices = @transform_0, window_bounds = array<i64: 16, 32>}, {transform_indices = @transform_1, window_bounds = array<i64: 32, 512>}, {transform_indices = @transform_2, window_bounds = array<i64: 1, 512>}, {transform_indices = @transform_3, window_bounds = array<i64: 16, 512>}]} {
    %c0 = arith.constant 0 : index
    %c0_0 = arith.constant 0 : index
    %0 = vector.load %arg1[%c0, %c0_0] : memref<16x32xf32, #tpu.memory_space<vmem>>, vector<16x32xf32>
    %c0_1 = arith.constant 0 : index
    %c0_2 = arith.constant 0 : index
    %1 = vector.load %arg2[%c0_1, %c0_2] : memref<32x512xf32, #tpu.memory_space<vmem>>, vector<32x512xf32>
    %cst = arith.constant dense<0.000000e+00> : vector<16x512xf32>
    %2 = tpu.matmul %0, %1, %cst {dimension_numbers = #tpu.dot_dimension_numbers<[1], [0], [0], [1], [0, 0, 1, 1], [], []>} : vector<16x32xf32>, vector<32x512xf32>, vector<16x512xf32> -> vector<16x512xf32>
    %c0_3 = arith.constant 0 : index
    %c0_4 = arith.constant 0 : index
    %3 = vector.load %arg3[%c0_3, %c0_4] : memref<1x512xf32, #tpu.memory_space<vmem>>, vector<1x512xf32>
    %4 = vector.broadcast %3 : vector<1x512xf32> to vector<16x512xf32>
    %5 = arith.addf %2, %4 : vector<16x512xf32>
    %c0_5 = arith.constant 0 : index
    %c0_6 = arith.constant 0 : index
    %6 = vector.load %arg4[%c0_5, %c0_6] : memref<16x512xf32, #tpu.memory_space<vmem>>, vector<16x512xf32>
    tpu.vector_store %arg4[%c0_5, %c0_6], %5 {strides = array<i32>} : memref<16x512xf32, #tpu.memory_space<vmem>>, vector<16x512xf32>,
    return
  }
  func.func @transform_0(%arg0: i32) -> (i32, i32) {
    %c0_i32 = arith.constant 0 : i32
    %c0_i32_0 = arith.constant 0 : i32
    %c0_i32_1 = arith.constant 0 : i32
    return %c0_i32, %c0_i32_0 : i32, i32
  }
  func.func @transform_1(%arg0: i32) -> (i32, i32) {
    %c0_i32 = arith.constant 0 : i32
    %c0_i32_0 = arith.constant 0 : i32
    return %c0_i32, %arg0 : i32, i32
  }
  func.func @transform_2(%arg0: i32) -> (i32, i32) {
    %c0_i32 = arith.constant 0 : i32
    %c0_i32_0 = arith.constant 0 : i32
    return %c0_i32, %arg0 : i32, i32
  }
  func.func @transform_3(%arg0: i32) -> (i32, i32) {
    %c0_i32 = arith.constant 0 : i32
    %c0_i32_0 = arith.constant 0 : i32
    return %c0_i32, %arg0 : i32, i32
  }
}

</mosaic_0001>

<llo_original>
// kernel: tpu_custom_call.1
$region0: #{tpu_custom_call.1}
  #allocation0 [shape = 'u32[]', space=smem, size = 0x4, offset = 0x4, fixed_abs, tag = 'smem constant byte address 0x4 - core index']
  #allocation1 [shape = 'u32[144,128]{1,0:T(1,128)}', space=vmem, size = 0x12000, scoped, tag = 'internal scratch']
  %s0 = inlined_call_operand.hbm [shape: f32[16,32], index: 0, kind: input, shape index: {}]
  %s1 = inlined_call_operand.hbm [shape: f32[32,512], index: 1, kind: input, shape index: {}]
  %s2 = inlined_call_operand.hbm [shape: f32[1,512], index: 2, kind: input, shape index: {}]
  %s3 = inlined_call_operand.hbm [shape: f32[16,512], index: 3, kind: output, shape index: {}]
  %s4 = sld [smem:[#allocation0]]
  $region34: #{tpu_custom_call.1} parent=0
    _
  %s6 = ssub.s32 1, %s4
  %s7 = scalar_select 0, %s6, %s4
  $region1: #{tpu_custom_call.1} parent=0
    #allocation2 [shape = 'u8[8192]{0}', space=vmem, size = 0x2000, scoped, tag = 'input window, operand 0, single buffered']
    #allocation3 [shape = 's32[1]{0}', space=sflag, size = 0x4, scoped, tag = 'scoped memory for tpu_custom_call.1']
    #allocation4 [shape = 's32[1]{0}', space=sflag, size = 0x4, scoped, tag = 'scoped memory for tpu_custom_call.1']
    #allocation5 [shape = 'u8[65536]{0}', space=vmem, size = 0x10000, scoped, tag = 'input window, operand 1, single buffered']
    #allocation6 [shape = 's32[1]{0}', space=sflag, size = 0x4, scoped, tag = 'scoped memory for tpu_custom_call.1']
    #allocation7 [shape = 'u8[2048]{0}', space=vmem, size = 0x800, scoped, tag = 'input window, operand 2, single buffered']
    #allocation8 [shape = 'u8[32768]{0}', space=vmem, size = 0x8000, scoped, tag = 'output window, operand 0, single buffered']
    %8 = vsyncpa [#allocation3], 0
    %9 = vsyncpa [#allocation6], 0
    %10 = vsyncpa [#allocation4], 0
    // Predicated region
    $region2: #{tpu_custom_call.1} parent=1 // pred_check
      _
    $region3: #{tpu_custom_call.1} parent=1 // pred_check_branch
      %12 = sbr.rel (0) target = $region5
    $region4: #{tpu_custom_call.1} parent=1 // pred_region
      %s14 = ssub.s32 256, 256
      %15 = vsyncadd [#allocation3], %s14
      %s16 = sshll.u32 [#allocation2], 4
      %s17 = int_to_ptr.vmem [resolvable:$true] %s16
      %22 = dma.hbm_to_vmem [thread:$0]  %s0, 256, %s17, [#allocation3], 128, 128, 8
    $region5: #{tpu_custom_call.1} parent=1 // pred_fallthru
      _
    // Predicated region
    $region6: #{tpu_custom_call.1} parent=1 // pred_check
      _
    $region7: #{tpu_custom_call.1} parent=1 // pred_check_branch
      %24 = sbr.rel (0) target = $region9
    $region8: #{tpu_custom_call.1} parent=1 // pred_region
      %s26 = ssub.s32 2048, 2048
      %27 = vsyncadd [#allocation6], %s26
      %s28 = sshll.u32 [#allocation5], 4
      %s29 = int_to_ptr.vmem [resolvable:$true] %s28
      %34 = dma.hbm_to_vmem [thread:$0]  %s1, 2048, %s29, [#allocation6], 512, 512, 32
    $region9: #{tpu_custom_call.1} parent=1 // pred_fallthru
      _
    // Predicated region
    $region10: #{tpu_custom_call.1} parent=1 // pred_check
      _
    $region11: #{tpu_custom_call.1} parent=1 // pred_check_branch
      %36 = sbr.rel (0) target = $region13
    $region12: #{tpu_custom_call.1} parent=1 // pred_region
      %s38 = ssub.s32 64, 64
      %39 = vsyncadd [#allocation6], %s38
      %s41 = sshll.u32 [#allocation7], 4
      %s42 = int_to_ptr.vmem [resolvable:$true] %s41
      %44 = dma.hbm_to_vmem [thread:$0]  %s2, 64, %s42, [#allocation6]
    $region13: #{tpu_custom_call.1} parent=1 // pred_fallthru
      _
    // Predicated region
    $region14: #{tpu_custom_call.1} parent=1 // pred_check
      _
    $region15: #{tpu_custom_call.1} parent=1 // pred_check_branch
      %46 = sbr.rel (0) target = $region17
    $region16: #{tpu_custom_call.1} parent=1 // pred_region
      %47 = dma.done [#allocation3], 256
    $region17: #{tpu_custom_call.1} parent=1 // pred_fallthru
      _
    // Predicated region
    $region18: #{tpu_custom_call.1} parent=1 // pred_check
      _
    $region19: #{tpu_custom_call.1} parent=1 // pred_check_branch
      %49 = sbr.rel (0) target = $region21
    $region20: #{tpu_custom_call.1} parent=1 // pred_region
      %50 = dma.done [#allocation6], 2048
    $region21: #{tpu_custom_call.1} parent=1 // pred_fallthru
      _
    // Predicated region
    $region22: #{tpu_custom_call.1} parent=1 // pred_check
      _
    $region23: #{tpu_custom_call.1} parent=1 // pred_check_branch
      %52 = sbr.rel (0) target = $region25
    $region24: #{tpu_custom_call.1} parent=1 // pred_region
      %53 = dma.done [#allocation6], 64
    $region25: #{tpu_custom_call.1} parent=1 // pred_fallthru
      _
    %v54 = vld [vmem:[#allocation2] sm:$0xff]
    %v55 = vld [vmem:[#allocation2 + $0x8] sm:$0xff]
    %v56 = vld [vmem:[#allocation5] sm:$0xff]
    %v57 = vld [vmem:[#allocation5 + $0x8] sm:$0xff]
    %v58 = vld [vmem:[#allocation5 + $0x10] sm:$0xff]
    %v59 = vld [vmem:[#allocation5 + $0x18] sm:$0xff]
    %v60 = vld [vmem:[#allocation5 + $0x20] sm:$0xff]
    %v61 = vld [vmem:[#allocation5 + $0x28] sm:$0xff]
    %v62 = vld [vmem:[#allocation5 + $0x30] sm:$0xff]
    %v63 = vld [vmem:[#allocation5 + $0x38] sm:$0xff]
    %v64 = vld [vmem:[#allocation5 + $0x40] sm:$0xff]
    %v65 = vld [vmem:[#allocation5 + $0x48] sm:$0xff]
    %v66 = vld [vmem:[#allocation5 + $0x50] sm:$0xff]
    %v67 = vld [vmem:[#allocation5 + $0x58] sm:$0xff]
    %v68 = vld [vmem:[#allocation5 + $0x60] sm:$0xff]
    %v69 = vld [vmem:[#allocation5 + $0x68] sm:$0xff]
    %v70 = vld [vmem:[#allocation5 + $0x70] sm:$0xff]
    %v71 = vld [vmem:[#allocation5 + $0x78] sm:$0xff]
    %v72 = vld [vmem:[#allocation7] sm:$0xf]
    %v74 = vlaneseq
    %v75 = vshrl.u32 %v74, 7
    %v76 = vsub.s32 0, %v75
    %v77 = vrot.slane %v72, %v76
    %v78 = vlaneseq
    %v79 = vshrl.u32 %v78, 7
    %v80 = vsub.s32 1, %v79
    %v81 = vrot.slane %v72, %v80
    %v82 = vlaneseq
    %v83 = vshrl.u32 %v82, 7
    %v84 = vsub.s32 2, %v83
    %v85 = vrot.slane %v72, %v84
    %v86 = vlaneseq
    %v87 = vshrl.u32 %v86, 7
    %v88 = vsub.s32 3, %v87
    %v89 = vrot.slane %v72, %v88
    %vm94 = vcmask 261120
    %v96 = vsel %vm94, %v54, 0
    %v99 = vsel %vm94, %v55, 0
    %101 = vmatprep.subr.mxu0 0.0
    %102 = vmatpush1.msra.mxu0 0.0
    %103 = vmatprep.subr.mxu0 0.0
    %104 = vmatpush1.msra.mxu0 0.0
    %105 = vmatprep.subr.mxu0 0.0
    %106 = vmatpush1.msra.mxu0 0.0
    %107 = vmatprep.subr.mxu0 0.0
    %108 = vmatpush1.msra.mxu0 0.0
    %109 = vmatprep.subr.mxu0 0.0
    %110 = vmatpush1.msra.mxu0 0.0
    %111 = vmatprep.subr.mxu0 0.0
    %112 = vmatpush1.msra.mxu0 0.0
    %113 = vmatprep.subr.mxu0 0.0
    %114 = vmatpush1.msra.mxu0 0.0
    %115 = vmatprep.subr.mxu0 0.0
    %116 = vmatpush1.msra.mxu0 0.0
    %117 = vmatprep.subr.mxu0 0.0
    %118 = vmatpush1.msra.mxu0 0.0
    %119 = vmatprep.subr.mxu0 0.0
    %120 = vmatpush1.msra.mxu0 0.0
    %121 = vmatprep.subr.mxu0 0.0
    %122 = vmatpush1.msra.mxu0 0.0
    %123 = vmatprep.subr.mxu0 0.0
    %124 = vmatpush1.msra.mxu0 0.0
    %125 = vmatprep.subr.mxu0 %v69
    %126 = vmatpush1.msra.mxu0 %v68
    %127 = vmatprep.subr.mxu0 %v65
    %128 = vmatpush1.msra.mxu0 %v64
    %129 = vmatprep.subr.mxu0 %v61
    %130 = vmatpush1.msra.mxu0 %v60
    %131 = vmatprep.subr.mxu0 %v57
    %132 = vmatpush1.msra.mxu0 %v56
    %133 = vmatprep.subr.mxu0 0.0
    %134 = vmatpush2.msra.mxu0 0.0
    %135 = vmatprep.subr.mxu0 0.0
    %136 = vmatpush2.msra.mxu0 0.0
    %137 = vmatprep.subr.mxu0 0.0
    %138 = vmatpush2.msra.mxu0 0.0
    %139 = vmatprep.subr.mxu0 0.0
    %140 = vmatpush2.msra.mxu0 0.0
    %141 = vmatprep.subr.mxu0 0.0
    %142 = vmatpush2.msra.mxu0 0.0
    %143 = vmatprep.subr.mxu0 0.0
    %144 = vmatpush2.msra.mxu0 0.0
    %145 = vmatprep.subr.mxu0 0.0
    %146 = vmatpush2.msra.mxu0 0.0
    %147 = vmatprep.subr.mxu0 0.0
    %148 = vmatpush2.msra.mxu0 0.0
    %149 = vmatprep.subr.mxu0 0.0
    %150 = vmatpush2.msra.mxu0 0.0
    %151 = vmatprep.subr.mxu0 0.0
    %152 = vmatpush2.msra.mxu0 0.0
    %153 = vmatprep.subr.mxu0 0.0
    %154 = vmatpush2.msra.mxu0 0.0
    %155 = vmatprep.subr.mxu0 0.0
    %156 = vmatpush2.msra.mxu0 0.0
    %157 = vmatprep.subr.mxu0 0.0
    %158 = vmatpush2.msra.mxu0 0.0
    %159 = vmatprep.subr.mxu0 0.0
    %160 = vmatpush2.msra.mxu0 0.0
    %161 = vmatprep.subr.mxu0 0.0
    %162 = vmatpush2.msra.mxu0 0.0
    %163 = vmatprep.subr.mxu0 0.0
    %164 = vmatpush2.msra.mxu0 0.0
    %165 = vmatprep.mubr.f32.mxu0 0.0
    %166 = vmatmul.mubr.f32.gmra.mxu0 %v96
    %v167 = vpop.f32.mrf.mxu0
    %v168 = vadd.f32 %v77, %v167
    %v169 = vpop.f32.mrf.mxu0
    %v170 = vadd.f32 %v81, %v169
    %171 = vmatprep.mubr.f32.mxu0 0.0
    %172 = vmatmul.mubr.f32.gmra.mxu0 %v99
    %v173 = vpop.f32.mrf.mxu0
    %v174 = vadd.f32 %v77, %v173
    %v175 = vpop.f32.mrf.mxu0
    %v176 = vadd.f32 %v81, %v175
    %177 = vdwg.mxu0
    %178 = vmatprep.subr.mxu0 0.0
    %179 = vmatpush1.msra.mxu0 0.0
    %180 = vmatprep.subr.mxu0 0.0
    %181 = vmatpush1.msra.mxu0 0.0
    %182 = vmatprep.subr.mxu0 0.0
    %183 = vmatpush1.msra.mxu0 0.0
    %184 = vmatprep.subr.mxu0 0.0
    %185 = vmatpush1.msra.mxu0 0.0
    %186 = vmatprep.subr.mxu0 0.0
    %187 = vmatpush1.msra.mxu0 0.0
    %188 = vmatprep.subr.mxu0 0.0
    %189 = vmatpush1.msra.mxu0 0.0
    %190 = vmatprep.subr.mxu0 0.0
    %191 = vmatpush1.msra.mxu0 0.0
    %192 = vmatprep.subr.mxu0 0.0
    %193 = vmatpush1.msra.mxu0 0.0
    %194 = vmatprep.subr.mxu0 0.0
    %195 = vmatpush1.msra.mxu0 0.0
    %196 = vmatprep.subr.mxu0 0.0
    %197 = vmatpush1.msra.mxu0 0.0
    %198 = vmatprep.subr.mxu0 0.0
    %199 = vmatpush1.msra.mxu0 0.0
    %200 = vmatprep.subr.mxu0 0.0
    %201 = vmatpush1.msra.mxu0 0.0
    %202 = vmatprep.subr.mxu0 %v71
    %203 = vmatpush1.msra.mxu0 %v70
    %204 = vmatprep.subr.mxu0 %v67
    %205 = vmatpush1.msra.mxu0 %v66
    %206 = vmatprep.subr.mxu0 %v63
    %207 = vmatpush1.msra.mxu0 %v62
    %208 = vmatprep.subr.mxu0 %v59
    %209 = vmatpush1.msra.mxu0 %v58
    %210 = vmatprep.subr.mxu0 0.0
    %211 = vmatpush2.msra.mxu0 0.0
    %212 = vmatprep.subr.mxu0 0.0
    %213 = vmatpush2.msra.mxu0 0.0
    %214 = vmatprep.subr.mxu0 0.0
    %215 = vmatpush2.msra.mxu0 0.0
    %216 = vmatprep.subr.mxu0 0.0
    %217 = vmatpush2.msra.mxu0 0.0
    %218 = vmatprep.subr.mxu0 0.0
    %219 = vmatpush2.msra.mxu0 0.0
    %220 = vmatprep.subr.mxu0 0.0
    %221 = vmatpush2.msra.mxu0 0.0
    %222 = vmatprep.subr.mxu0 0.0
    %223 = vmatpush2.msra.mxu0 0.0
    %224 = vmatprep.subr.mxu0 0.0
    %225 = vmatpush2.msra.mxu0 0.0
    %226 = vmatprep.subr.mxu0 0.0
    %227 = vmatpush2.msra.mxu0 0.0
    %228 = vmatprep.subr.mxu0 0.0
    %229 = vmatpush2.msra.mxu0 0.0
    %230 = vmatprep.subr.mxu0 0.0
    %231 = vmatpush2.msra.mxu0 0.0
    %232 = vmatprep.subr.mxu0 0.0
    %233 = vmatpush2.msra.mxu0 0.0
    %234 = vmatprep.subr.mxu0 0.0
    %235 = vmatpush2.msra.mxu0 0.0
    %236 = vmatprep.subr.mxu0 0.0
    %237 = vmatpush2.msra.mxu0 0.0
    %238 = vmatprep.subr.mxu0 0.0
    %239 = vmatpush2.msra.mxu0 0.0
    %240 = vmatprep.subr.mxu0 0.0
    %241 = vmatpush2.msra.mxu0 0.0
    %242 = vmatprep.mubr.f32.mxu0 0.0
    %243 = vmatmul.mubr.f32.gmra.mxu0 %v96
    %v244 = vpop.f32.mrf.mxu0
    %v245 = vadd.f32 %v85, %v244
    %v246 = vpop.f32.mrf.mxu0
    %v247 = vadd.f32 %v89, %v246
    %248 = vmatprep.mubr.f32.mxu0 0.0
    %249 = vmatmul.mubr.f32.gmra.mxu0 %v99
    %v250 = vpop.f32.mrf.mxu0
    %v251 = vadd.f32 %v85, %v250
    %v252 = vpop.f32.mrf.mxu0
    %v253 = vadd.f32 %v89, %v252
    %254 = vdwg.mxu0
    %255 = vst [vmem:[#allocation8] sm:$0xff] %v168
    %256 = vst [vmem:[#allocation8 + $0x8] sm:$0xff] %v170
    %257 = vst [vmem:[#allocation8 + $0x10] sm:$0xff] %v245
    %258 = vst [vmem:[#allocation8 + $0x18] sm:$0xff] %v247
    %259 = vst [vmem:[#allocation8 + $0x20] sm:$0xff] %v174
    %260 = vst [vmem:[#allocation8 + $0x28] sm:$0xff] %v176
    %261 = vst [vmem:[#allocation8 + $0x30] sm:$0xff] %v251
    %262 = vst [vmem:[#allocation8 + $0x38] sm:$0xff] %v253
    // Predicated region
    $region26: #{tpu_custom_call.1} parent=1 // pred_check
      _
    $region27: #{tpu_custom_call.1} parent=1 // pred_check_branch
      %264 = sbr.rel (0) target = $region29
    $region28: #{tpu_custom_call.1} parent=1 // pred_region
      %s266 = ssub.s32 1024, 1024
      %267 = vsyncadd [#allocation4], %s266
      %s268 = sshll.u32 [#allocation8], 4
      %s269 = int_to_ptr.vmem [resolvable:$true] %s268
      %274 = dma.vmem_to_hbm [thread:$0]  %s269, 1024, %s3, [#allocation4], 512, 512, 32
    $region29: #{tpu_custom_call.1} parent=1 // pred_fallthru
      _
    // Predicated region
    $region30: #{tpu_custom_call.1} parent=1 // pred_check
      _
    $region31: #{tpu_custom_call.1} parent=1 // pred_check_branch
      %276 = sbr.rel (0) target = $region33
    $region32: #{tpu_custom_call.1} parent=1 // pred_region
      %277 = dma.done [#allocation4], 1024
    $region33: #{tpu_custom_call.1} parent=1 // pred_fallthru
      _
    %278 = vsyncpa [#allocation3], 1
    %279 = vsyncpa [#allocation6], 1
    %280 = vsyncpa [#allocation4], 1

</llo_original>
